<compile_context>
chip_gen: v7x
topology: tpu7x:2x2x1
jax: 0.10.0
libtpu: 0.0.40
codegen_flags: <defaults>
</compile_context>

<pallas_src>
import functools
import math

import jax
import jax.numpy as jnp
from jax import lax
from jax.experimental import pallas as pl
from jax.experimental.pallas import tpu as pltpu

_LANE = 128   # lane width (last dim)
_SUB = 8      # sublane width (second-to-last dim)
_BN_EPS = 1e-5        # PyTorch BatchNorm1d default eps
_NEG_SLOPE = 0.01     # LeakyReLU slope


def _round_up(n, m):
    return ((n + m - 1) // m) * m


def _pad2d(x, rows, cols):
    r, c = x.shape
    return jnp.pad(x, ((0, rows - r), (0, cols - c)))


# ---------------------------------------------------------------------------
# Kernel 1: generator MLP (Linear->BN->LeakyReLU x3, Linear->Tanh) -> w.
# Single grid point, everything VMEM-resident.  D is only padded to a
# sublane multiple here.
# ---------------------------------------------------------------------------
def _mlp_kernel(noise_ref,
                w1_ref, b1_ref, w2_ref, b2_ref,
                w3_ref, b3_ref, w4_ref, b4_ref,
                w_ref, *, D, mm_dtype):
    d_sub = w_ref.shape[0]
    inv_D = jnp.float32(1.0 / D)
    # Rows >= D are zero padding; they must not contribute to BN statistics.
    row_mask = (lax.broadcasted_iota(jnp.int32, (d_sub, 1), 0) < D
                ).astype(jnp.float32)

    def linear(a, w_io_ref, b_ref):
        # mm_dtype operands on the MXU, f32 accumulation, bias add in f32.
        return jnp.dot(a.astype(mm_dtype), w_io_ref[...],
                       preferred_element_type=jnp.float32) + b_ref[...]

    def bn_lrelu(h):
        # training-mode BatchNorm1d (default affine gamma=1, beta=0).
        # Two-pass masked statistics over the D real rows.
        mu = jnp.sum(h * row_mask, axis=0, keepdims=True) * inv_D
        hc = (h - mu) * row_mask
        var = jnp.sum(hc * hc, axis=0, keepdims=True) * inv_D
        hn = (h - mu) * lax.rsqrt(var + _BN_EPS)
        return jnp.where(hn >= 0, hn, _NEG_SLOPE * hn)

    h = bn_lrelu(linear(noise_ref[...], w1_ref, b1_ref))
    h = bn_lrelu(linear(h, w2_ref, b2_ref))
    h = bn_lrelu(linear(h, w3_ref, b3_ref))
    w_ref[...] = jnp.tanh(linear(h, w4_ref, b4_ref))


# ---------------------------------------------------------------------------
# Kernel 2: random Fourier features  z = sqrt(1/D) * [cos(b w^T), sin(b w^T)].
# Gridded over B tiles ("parallel" -> both TensorCores on v7x; auto
# double-buffered b_data fetch / z writeback overlap the EUP cos/sin).
# ---------------------------------------------------------------------------
def _rff_kernel(bdata_ref, w_ref, z_ref, *, mm_dtype, scale):
    d_sub = w_ref.shape[0]
    # proj = b_data @ w.T, contracting the nx axis of both operands on the MXU.
    # TODO(synk): confirm via pl.lower_as_mlir that this NT contraction does
    # not insert an XLU relayout of w; if it does, emit w pre-transposed from
    # the MLP kernel instead.
    proj = lax.dot_general(
        bdata_ref[...], w_ref[...].astype(mm_dtype),
        dimension_numbers=(((1,), (1,)), ((), ())),
        preferred_element_type=jnp.float32)
    s = jnp.float32(scale)
    z_ref[:, :d_sub] = s * jnp.cos(proj)
    z_ref[:, d_sub:] = s * jnp.sin(proj)


def prepare_params(params, mm_dtype=jnp.bfloat16):
    """Pad (lanes->128, rows->as-needed) and cast the static generator params
    once, outside the per-call path.  Weights are cast to the MXU operand
    dtype; biases stay f32 (added after f32 accumulation)."""
    nz, h1 = params["w1"].shape
    h2 = params["w2"].shape[1]
    h3 = params["w3"].shape[1]
    nx = params["w4"].shape[1]
    nzp, h1p, h2p, h3p, nxp = (_round_up(d, _LANE)
                               for d in (nz, h1, h2, h3, nx))
    f32 = jnp.float32
    return {
        "w1": _pad2d(params["w1"].astype(f32), nzp, h1p).astype(mm_dtype),
        "b1": _pad2d(params["b1"].astype(f32), 1, h1p),
        "w2": _pad2d(params["w2"].astype(f32), h1p, h2p).astype(mm_dtype),
        "b2": _pad2d(params["b2"].astype(f32), 1, h2p),
        "w3": _pad2d(params["w3"].astype(f32), h2p, h3p).astype(mm_dtype),
        "b3": _pad2d(params["b3"].astype(f32), 1, h3p),
        "w4": _pad2d(params["w4"].astype(f32), h3p, nxp).astype(mm_dtype),
        "b4": _pad2d(params["b4"].astype(f32), 1, nxp),
    }


@functools.partial(jax.jit, static_argnames=("mm_dtype",))
def netg_forward(noise, b_data, padded_params, mm_dtype=jnp.bfloat16):
    """netG forward.  `padded_params` must come from prepare_params with the
    same mm_dtype.  Returns (z, w) with unpadded shapes (B, 2*D) / (D, nx)."""
    D, nz = noise.shape
    B, nx = b_data.shape
    pp = padded_params
    nzp, h1p = pp["w1"].shape
    h2p = pp["w2"].shape[1]
    h3p = pp["w3"].shape[1]
    nxp = pp["w4"].shape[1]
    assert nzp >= nz and nxp >= nx

    d_sub = _round_up(D, _SUB)          # D as a row/sublane dim (MLP, w)
    mm_bytes = jnp.dtype(mm_dtype).itemsize
    vmem = pltpu.MemorySpace.VMEM

    # ---- phase 1: generator MLP -> w --------------------------------------
    noise_p = _pad2d(noise.astype(jnp.float32), d_sub, nzp).astype(mm_dtype)
    mlp_inputs = (noise_p, pp["w1"], pp["b1"], pp["w2"], pp["b2"],
                  pp["w3"], pp["b3"], pp["w4"], pp["b4"])

    act = d_sub * max(h1p, h2p, h3p, nxp) * 4
    bytes1 = (sum(int(x.size) * x.dtype.itemsize for x in mlp_inputs)
              + d_sub * nxp * 4 + 4 * act)
    flops1 = 2 * d_sub * (nzp * h1p + h1p * h2p + h2p * h3p + h3p * nxp)
    trans1 = h1p + h2p + h3p + d_sub * nxp   # rsqrt per BN feature + tanh

    w_full = pl.pallas_call(
        functools.partial(_mlp_kernel, D=D, mm_dtype=mm_dtype),
        out_shape=jax.ShapeDtypeStruct((d_sub, nxp), jnp.float32),
        in_specs=[pl.BlockSpec(memory_space=vmem)] * len(mlp_inputs),
        out_specs=pl.BlockSpec(memory_space=vmem),
        compiler_params=pltpu.CompilerParams(
            vmem_limit_bytes=int(min(64 << 20, 2 * bytes1 + (16 << 20)))),
        cost_estimate=pl.CostEstimate(
            flops=flops1, transcendentals=trans1, bytes_accessed=bytes1),
    )(*mlp_inputs)

    # ---- phase 2: random Fourier features z --------------------------------
    if B <= 256:
        bp = _round_up(B, _SUB)
        tile_b = bp
    else:
        tile_b = 256
        bp = _round_up(B, tile_b)

    bdata_p = _pad2d(b_data.astype(jnp.float32), bp, nxp).astype(mm_dtype)

    tile_bytes = (2 * tile_b * nxp * mm_bytes      # b_data tiles (dbl-buf)
                  + 2 * d_sub * nxp * 4            # w (f32)
                  + 2 * tile_b * 2 * d_sub * 4     # z tiles (dbl-buf)
                  + 3 * tile_b * d_sub * 4)        # proj / cos / sin temps
    bytes2 = bp * nxp * mm_bytes + d_sub * nxp * 4 + bp * 2 * d_sub * 4
    flops2 = 2 * bp * nxp * d_sub
    trans2 = 2 * bp * d_sub

    z_full = pl.pallas_call(
        functools.partial(_rff_kernel, mm_dtype=mm_dtype,
                          scale=math.sqrt(1.0 / D)),
        out_shape=jax.ShapeDtypeStruct((bp, 2 * d_sub), jnp.float32),
        grid=(bp // tile_b,),
        in_specs=[pl.BlockSpec((tile_b, nxp), lambda i: (i, 0)),
                  pl.BlockSpec((d_sub, nxp), lambda i: (0, 0))],
        out_specs=pl.BlockSpec((tile_b, 2 * d_sub), lambda i: (i, 0)),
        compiler_params=pltpu.CompilerParams(
            dimension_semantics=("parallel",),
            vmem_limit_bytes=int(min(64 << 20, 2 * tile_bytes + (16 << 20)))),
        cost_estimate=pl.CostEstimate(
            flops=flops2, transcendentals=trans2, bytes_accessed=bytes2),
    )(bdata_p, w_full)

    # ---- unpad (no concat when D is already row-aligned) -------------------
    w = w_full if (D == d_sub and nx == nxp) else w_full[:D, :nx]
    if D == d_sub:
        z = z_full if B == bp else z_full[:B]
    else:
        z = jnp.concatenate(
            [z_full[:B, :D], z_full[:B, d_sub:d_sub + D]], axis=1)
    return z, w


def init_params(key, nx, nz, nfm):
    """Deterministic PyTorch-Linear-style init. Weights stored as (in, out)."""
    dims = [(nz, 2 * nfm), (2 * nfm, nfm), (nfm, nfm), (nfm, nx)]
    params = {}
    keys = jax.random.split(key, 2 * len(dims))
    for i, (fan_in, fan_out) in enumerate(dims):
        bound = 1.0 / math.sqrt(fan_in)
        params[f"w{i+1}"] = jax.random.uniform(
            keys[2 * i], (fan_in, fan_out), jnp.float32, -bound, bound)
        params[f"b{i+1}"] = jax.random.uniform(
            keys[2 * i + 1], (1, fan_out), jnp.float32, -bound, bound)
    return params


def _netg_reference(noise, b_data, params):
    """Pure-JAX reference (training-mode BN, default affine)."""
    def bn_lrelu(h):
        mu = jnp.mean(h, axis=0, keepdims=True)
        var = jnp.mean((h - mu) ** 2, axis=0, keepdims=True)
        hn = (h - mu) / jnp.sqrt(var + _BN_EPS)
        return jnp.where(hn >= 0, hn, _NEG_SLOPE * hn)
    h = bn_lrelu(noise @ params["w1"] + params["b1"])
    h = bn_lrelu(h @ params["w2"] + params["b2"])
    h = bn_lrelu(h @ params["w3"] + params["b3"])
    w = jnp.tanh(h @ params["w4"] + params["b4"])
    proj = b_data @ w.T
    scale = math.sqrt(1.0 / noise.shape[0])
    z = jnp.concatenate([scale * jnp.cos(proj), scale * jnp.sin(proj)], axis=1)
    return z, w


if __name__ == "__main__":
    # Small shapes consistent with the module.
    nx, D, nz, nfm = 4, 8, 16, 32
    B = 2

    key = jax.random.PRNGKey(0)
    k_noise, k_data, k_params = jax.random.split(key, 3)

    noise = jax.random.normal(k_noise, (D, nz), jnp.float32)
    b_data = jax.random.normal(k_data, (B, nx), jnp.float32)
    params = init_params(k_params, nx, nz, nfm)

    z_gold, w_gold = _netg_reference(noise, b_data, params)

    # f32 MXU path: faithful to the PyTorch f32 forward.
    pp32 = prepare_params(params, mm_dtype=jnp.float32)
    z32, w32 = netg_forward(noise, b_data, pp32, mm_dtype=jnp.float32)
    jax.block_until_ready((z32, w32))
    assert z32.shape == (B, 2 * D) and w32.shape == (D, nx)
    err32 = max(float(jnp.max(jnp.abs(z32 - z_gold))),
                float(jnp.max(jnp.abs(w32 - w_gold))))
    assert err32 < 1e-3, f"f32 path max abs error {err32}"

    # Default path: bf16 MXU operands, f32 accumulation (looser tolerance).
    pp16 = prepare_params(params)                 # bf16 weights
    z, w = netg_forward(noise, b_data, pp16)      # mm_dtype defaults to bf16
    jax.block_until_ready((z, w))
    assert z.shape == (B, 2 * D) and w.shape == (D, nx)
    err16 = max(float(jnp.max(jnp.abs(z - z_gold))),
                float(jnp.max(jnp.abs(w - w_gold))))
    assert err16 < 5e-2, f"bf16 path max abs error {err16}"

    # TODO(synk): BatchNorm running-stat buffer updates (a PyTorch training-
    # mode side effect) are not emulated; only the forward outputs are made.
    print("KERNEL_OK")
</pallas_src>

<mosaic_0001>
module attributes {stable_mosaic.version = 11 : i64} {
  func.func @_rff_kernel(%arg0: i32, %arg1: memref<8x128xf32, #tpu.memory_space<vmem>>, %arg2: memref<8x128xf32, #tpu.memory_space<vmem>>, %arg3: memref<8x16xf32, #tpu.memory_space<vmem>>) attributes {dimension_semantics = [#tpu.dimension_semantics<parallel>], iteration_bounds = array<i64: 1>, scalar_prefetch = 0 : i64, scratch_operands = 0 : i64, tpu.core_type = #tpu.core_type<tc>, window_params = [{transform_indices = @transform_0, window_bounds = array<i64: 8, 128>}, {pipeline_mode = #tpu.pipeline_mode<synchronous>, transform_indices = @transform_1, window_bounds = array<i64: 8, 128>}, {transform_indices = @transform_2, window_bounds = array<i64: 8, 16>}]} {
    %c0 = arith.constant 0 : index
    %c0_0 = arith.constant 0 : index
    %0 = vector.load %arg1[%c0, %c0_0] : memref<8x128xf32, #tpu.memory_space<vmem>>, vector<8x128xf32>
    %c0_1 = arith.constant 0 : index
    %c0_2 = arith.constant 0 : index
    %1 = vector.load %arg2[%c0_1, %c0_2] : memref<8x128xf32, #tpu.memory_space<vmem>>, vector<8x128xf32>
    %cst = arith.constant dense<0.000000e+00> : vector<8x8xf32>
    %2 = tpu.matmul %0, %1, %cst {dimension_numbers = #tpu.dot_dimension_numbers<[1], [1], [0], [0], [0, 0, 1, 0], [], []>} : vector<8x128xf32>, vector<8x128xf32>, vector<8x8xf32> -> vector<8x8xf32>
    %3 = math.cos %2 : vector<8x8xf32>
    %cst_3 = arith.constant 0.353553385 : f32
    %4 = vector.broadcast %cst_3 : f32 to vector<8x8xf32>
    %5 = arith.mulf %4, %3 : vector<8x8xf32>
    %c0_4 = arith.constant 0 : index
    %c0_5 = arith.constant 0 : index
    %6 = vector.load %arg3[%c0_4, %c0_5] : memref<8x16xf32, #tpu.memory_space<vmem>>, vector<8x8xf32>
    tpu.vector_store %arg3[%c0_4, %c0_5], %5 {strides = array<i32>} : memref<8x16xf32, #tpu.memory_space<vmem>>, vector<8x8xf32>,
    %7 = math.sin %2 : vector<8x8xf32>
    %cst_6 = arith.constant 0.353553385 : f32
    %8 = vector.broadcast %cst_6 : f32 to vector<8x8xf32>
    %9 = arith.mulf %8, %7 : vector<8x8xf32>
    %c0_7 = arith.constant 0 : index
    %c8 = arith.constant 8 : index
    %10 = vector.load %arg3[%c0_7, %c8] : memref<8x16xf32, #tpu.memory_space<vmem>>, vector<8x8xf32>
    tpu.vector_store %arg3[%c0_7, %c8], %9 {strides = array<i32>} : memref<8x16xf32, #tpu.memory_space<vmem>>, vector<8x8xf32>,
    return
  }
  func.func @transform_0(%arg0: i32) -> (i32, i32) {
    %c0_i32 = arith.constant 0 : i32
    %c0_i32_0 = arith.constant 0 : i32
    return %arg0, %c0_i32 : i32, i32
  }
  func.func @transform_1(%arg0: i32) -> (i32, i32) {
    %c0_i32 = arith.constant 0 : i32
    %c0_i32_0 = arith.constant 0 : i32
    %c0_i32_1 = arith.constant 0 : i32
    return %c0_i32, %c0_i32_0 : i32, i32
  }
  func.func @transform_2(%arg0: i32) -> (i32, i32) {
    %c0_i32 = arith.constant 0 : i32
    %c0_i32_0 = arith.constant 0 : i32
    return %arg0, %c0_i32 : i32, i32
  }
}

module attributes {stable_mosaic.version = 11 : i64} {
  func.func @_mlp_kernel(%arg0: memref<8x128xf32, #tpu.memory_space<vmem>>, %arg1: memref<128x128xf32, #tpu.memory_space<vmem>>, %arg2: memref<1x128xf32, #tpu.memory_space<vmem>>, %arg3: memref<128x128xf32, #tpu.memory_space<vmem>>, %arg4: memref<1x128xf32, #tpu.memory_space<vmem>>, %arg5: memref<128x128xf32, #tpu.memory_space<vmem>>, %arg6: memref<1x128xf32, #tpu.memory_space<vmem>>, %arg7: memref<128x128xf32, #tpu.memory_space<vmem>>, %arg8: memref<1x128xf32, #tpu.memory_space<vmem>>, %arg9: memref<8x128xf32, #tpu.memory_space<vmem>>) attributes {dimension_semantics = [], scalar_prefetch = 0 : i64, scratch_operands = 0 : i64, tpu.core_type = #tpu.core_type<tc>} {
    %0 = tpu.iota {dimensions = array<i32: 0>} : vector<8x1xi32>
    %c8_i32 = arith.constant 8 : i32
    %1 = vector.broadcast %c8_i32 : i32 to vector<8x1xi32>
    %2 = arith.cmpi slt, %0, %1 : vector<8x1xi32>
    %3 = arith.extui %2 : vector<8x1xi1> to vector<8x1xi32>
    %4 = arith.sitofp %3 : vector<8x1xi32> to vector<8x1xf32>
    %c0 = arith.constant 0 : index
    %c0_0 = arith.constant 0 : index
    %5 = vector.load %arg0[%c0, %c0_0] : memref<8x128xf32, #tpu.memory_space<vmem>>, vector<8x128xf32>
    %c0_1 = arith.constant 0 : index
    %c0_2 = arith.constant 0 : index
    %6 = vector.load %arg1[%c0_1, %c0_2] : memref<128x128xf32, #tpu.memory_space<vmem>>, vector<128x128xf32>
    %cst = arith.constant dense<0.000000e+00> : vector<8x128xf32>
    %7 = tpu.matmul %5, %6, %cst {dimension_numbers = #tpu.dot_dimension_numbers<[1], [0], [0], [1], [0, 0, 1, 1], [], []>} : vector<8x128xf32>, vector<128x128xf32>, vector<8x128xf32> -> vector<8x128xf32>
    %c0_3 = arith.constant 0 : index
    %c0_4 = arith.constant 0 : index
    %8 = vector.load %arg2[%c0_3, %c0_4] : memref<1x128xf32, #tpu.memory_space<vmem>>, vector<1x128xf32>
    %9 = vector.broadcast %8 : vector<1x128xf32> to vector<8x128xf32>
    %10 = arith.addf %7, %9 : vector<8x128xf32>
    %11 = vector.broadcast %4 : vector<8x1xf32> to vector<8x128xf32>
    %12 = arith.mulf %10, %11 : vector<8x128xf32>
    %cst_5 = arith.constant dense<0.000000e+00> : vector<128xf32>
    %13 = vector.multi_reduction <add>, %12, %cst_5 [0] : vector<8x128xf32> to vector<128xf32>
    %14 = vector.shape_cast %13 : vector<128xf32> to vector<1x128xf32>
    %cst_6 = arith.constant 1.250000e-01 : f32
    %15 = vector.broadcast %cst_6 : f32 to vector<1x128xf32>
    %16 = arith.mulf %14, %15 : vector<1x128xf32>
    %17 = vector.broadcast %16 : vector<1x128xf32> to vector<8x128xf32>
    %18 = arith.subf %10, %17 : vector<8x128xf32>
    %19 = vector.broadcast %4 : vector<8x1xf32> to vector<8x128xf32>
    %20 = arith.mulf %18, %19 : vector<8x128xf32>
    %21 = arith.mulf %20, %20 : vector<8x128xf32>
    %cst_7 = arith.constant dense<0.000000e+00> : vector<128xf32>
    %22 = vector.multi_reduction <add>, %21, %cst_7 [0] : vector<8x128xf32> to vector<128xf32>
    %23 = vector.shape_cast %22 : vector<128xf32> to vector<1x128xf32>
    %cst_8 = arith.constant 1.250000e-01 : f32
    %24 = vector.broadcast %cst_8 : f32 to vector<1x128xf32>
    %25 = arith.mulf %23, %24 : vector<1x128xf32>
    %26 = vector.broadcast %16 : vector<1x128xf32> to vector<8x128xf32>
    %27 = arith.subf %10, %26 : vector<8x128xf32>
    %cst_9 = arith.constant 9.99999974E-6 : f32
    %28 = vector.broadcast %cst_9 : f32 to vector<1x128xf32>
    %29 = arith.addf %25, %28 : vector<1x128xf32>
    %30 = math.rsqrt %29 : vector<1x128xf32>
    %31 = vector.broadcast %30 : vector<1x128xf32> to vector<8x128xf32>
    %32 = arith.mulf %27, %31 : vector<8x128xf32>
    %cst_10 = arith.constant 0.000000e+00 : f32
    %33 = vector.broadcast %cst_10 : f32 to vector<8x128xf32>
    %34 = arith.cmpf oge, %32, %33 : vector<8x128xf32>
    %cst_11 = arith.constant 0.00999999977 : f32
    %35 = vector.broadcast %cst_11 : f32 to vector<8x128xf32>
    %36 = arith.mulf %35, %32 : vector<8x128xf32>
    %37 = arith.select %34, %32, %36 : vector<8x128xi1>, vector<8x128xf32>
    %c0_12 = arith.constant 0 : index
    %c0_13 = arith.constant 0 : index
    %38 = vector.load %arg3[%c0_12, %c0_13] : memref<128x128xf32, #tpu.memory_space<vmem>>, vector<128x128xf32>
    %cst_14 = arith.constant dense<0.000000e+00> : vector<8x128xf32>
    %39 = tpu.matmul %37, %38, %cst_14 {dimension_numbers = #tpu.dot_dimension_numbers<[1], [0], [0], [1], [0, 0, 1, 1], [], []>} : vector<8x128xf32>, vector<128x128xf32>, vector<8x128xf32> -> vector<8x128xf32>
    %c0_15 = arith.constant 0 : index
    %c0_16 = arith.constant 0 : index
    %40 = vector.load %arg4[%c0_15, %c0_16] : memref<1x128xf32, #tpu.memory_space<vmem>>, vector<1x128xf32>
    %41 = vector.broadcast %40 : vector<1x128xf32> to vector<8x128xf32>
    %42 = arith.addf %39, %41 : vector<8x128xf32>
    %43 = vector.broadcast %4 : vector<8x1xf32> to vector<8x128xf32>
    %44 = arith.mulf %42, %43 : vector<8x128xf32>
    %cst_17 = arith.constant dense<0.000000e+00> : vector<128xf32>
    %45 = vector.multi_reduction <add>, %44, %cst_17 [0] : vector<8x128xf32> to vector<128xf32>
    %46 = vector.shape_cast %45 : vector<128xf32> to vector<1x128xf32>
    %cst_18 = arith.constant 1.250000e-01 : f32
    %47 = vector.broadcast %cst_18 : f32 to vector<1x128xf32>
    %48 = arith.mulf %46, %47 : vector<1x128xf32>
    %49 = vector.broadcast %48 : vector<1x128xf32> to vector<8x128xf32>
    %50 = arith.subf %42, %49 : vector<8x128xf32>
    %51 = vector.broadcast %4 : vector<8x1xf32> to vector<8x128xf32>
    %52 = arith.mulf %50, %51 : vector<8x128xf32>
    %53 = arith.mulf %52, %52 : vector<8x128xf32>
    %cst_19 = arith.constant dense<0.000000e+00> : vector<128xf32>
    %54 = vector.multi_reduction <add>, %53, %cst_19 [0] : vector<8x128xf32> to vector<128xf32>
    %55 = vector.shape_cast %54 : vector<128xf32> to vector<1x128xf32>
    %cst_20 = arith.constant 1.250000e-01 : f32
    %56 = vector.broadcast %cst_20 : f32 to vector<1x128xf32>
    %57 = arith.mulf %55, %56 : vector<1x128xf32>
    %58 = vector.broadcast %48 : vector<1x128xf32> to vector<8x128xf32>
    %59 = arith.subf %42, %58 : vector<8x128xf32>
    %cst_21 = arith.constant 9.99999974E-6 : f32
    %60 = vector.broadcast %cst_21 : f32 to vector<1x128xf32>
    %61 = arith.addf %57, %60 : vector<1x128xf32>
    %62 = math.rsqrt %61 : vector<1x128xf32>
    %63 = vector.broadcast %62 : vector<1x128xf32> to vector<8x128xf32>
    %64 = arith.mulf %59, %63 : vector<8x128xf32>
    %cst_22 = arith.constant 0.000000e+00 : f32
    %65 = vector.broadcast %cst_22 : f32 to vector<8x128xf32>
    %66 = arith.cmpf oge, %64, %65 : vector<8x128xf32>
    %cst_23 = arith.constant 0.00999999977 : f32
    %67 = vector.broadcast %cst_23 : f32 to vector<8x128xf32>
    %68 = arith.mulf %67, %64 : vector<8x128xf32>
    %69 = arith.select %66, %64, %68 : vector<8x128xi1>, vector<8x128xf32>
    %c0_24 = arith.constant 0 : index
    %c0_25 = arith.constant 0 : index
    %70 = vector.load %arg5[%c0_24, %c0_25] : memref<128x128xf32, #tpu.memory_space<vmem>>, vector<128x128xf32>
    %cst_26 = arith.constant dense<0.000000e+00> : vector<8x128xf32>
    %71 = tpu.matmul %69, %70, %cst_26 {dimension_numbers = #tpu.dot_dimension_numbers<[1], [0], [0], [1], [0, 0, 1, 1], [], []>} : vector<8x128xf32>, vector<128x128xf32>, vector<8x128xf32> -> vector<8x128xf32>
    %c0_27 = arith.constant 0 : index
    %c0_28 = arith.constant 0 : index
    %72 = vector.load %arg6[%c0_27, %c0_28] : memref<1x128xf32, #tpu.memory_space<vmem>>, vector<1x128xf32>
    %73 = vector.broadcast %72 : vector<1x128xf32> to vector<8x128xf32>
    %74 = arith.addf %71, %73 : vector<8x128xf32>
    %75 = vector.broadcast %4 : vector<8x1xf32> to vector<8x128xf32>
    %76 = arith.mulf %74, %75 : vector<8x128xf32>
    %cst_29 = arith.constant dense<0.000000e+00> : vector<128xf32>
    %77 = vector.multi_reduction <add>, %76, %cst_29 [0] : vector<8x128xf32> to vector<128xf32>
    %78 = vector.shape_cast %77 : vector<128xf32> to vector<1x128xf32>
    %cst_30 = arith.constant 1.250000e-01 : f32
    %79 = vector.broadcast %cst_30 : f32 to vector<1x128xf32>
    %80 = arith.mulf %78, %79 : vector<1x128xf32>
    %81 = vector.broadcast %80 : vector<1x128xf32> to vector<8x128xf32>
    %82 = arith.subf %74, %81 : vector<8x128xf32>
    %83 = vector.broadcast %4 : vector<8x1xf32> to vector<8x128xf32>
    %84 = arith.mulf %82, %83 : vector<8x128xf32>
    %85 = arith.mulf %84, %84 : vector<8x128xf32>
    %cst_31 = arith.constant dense<0.000000e+00> : vector<128xf32>
    %86 = vector.multi_reduction <add>, %85, %cst_31 [0] : vector<8x128xf32> to vector<128xf32>
    %87 = vector.shape_cast %86 : vector<128xf32> to vector<1x128xf32>
    %cst_32 = arith.constant 1.250000e-01 : f32
    %88 = vector.broadcast %cst_32 : f32 to vector<1x128xf32>
    %89 = arith.mulf %87, %88 : vector<1x128xf32>
    %90 = vector.broadcast %80 : vector<1x128xf32> to vector<8x128xf32>
    %91 = arith.subf %74, %90 : vector<8x128xf32>
    %cst_33 = arith.constant 9.99999974E-6 : f32
    %92 = vector.broadcast %cst_33 : f32 to vector<1x128xf32>
    %93 = arith.addf %89, %92 : vector<1x128xf32>
    %94 = math.rsqrt %93 : vector<1x128xf32>
    %95 = vector.broadcast %94 : vector<1x128xf32> to vector<8x128xf32>
    %96 = arith.mulf %91, %95 : vector<8x128xf32>
    %cst_34 = arith.constant 0.000000e+00 : f32
    %97 = vector.broadcast %cst_34 : f32 to vector<8x128xf32>
    %98 = arith.cmpf oge, %96, %97 : vector<8x128xf32>
    %cst_35 = arith.constant 0.00999999977 : f32
    %99 = vector.broadcast %cst_35 : f32 to vector<8x128xf32>
    %100 = arith.mulf %99, %96 : vector<8x128xf32>
    %101 = arith.select %98, %96, %100 : vector<8x128xi1>, vector<8x128xf32>
    %c0_36 = arith.constant 0 : index
    %c0_37 = arith.constant 0 : index
    %102 = vector.load %arg7[%c0_36, %c0_37] : memref<128x128xf32, #tpu.memory_space<vmem>>, vector<128x128xf32>
    %cst_38 = arith.constant dense<0.000000e+00> : vector<8x128xf32>
    %103 = tpu.matmul %101, %102, %cst_38 {dimension_numbers = #tpu.dot_dimension_numbers<[1], [0], [0], [1], [0, 0, 1, 1], [], []>} : vector<8x128xf32>, vector<128x128xf32>, vector<8x128xf32> -> vector<8x128xf32>
    %c0_39 = arith.constant 0 : index
    %c0_40 = arith.constant 0 : index
    %104 = vector.load %arg8[%c0_39, %c0_40] : memref<1x128xf32, #tpu.memory_space<vmem>>, vector<1x128xf32>
    %105 = vector.broadcast %104 : vector<1x128xf32> to vector<8x128xf32>
    %106 = arith.addf %103, %105 : vector<8x128xf32>
    %107 = math.tanh %106 : vector<8x128xf32>
    %c0_41 = arith.constant 0 : index
    %c0_42 = arith.constant 0 : index
    %108 = vector.load %arg9[%c0_41, %c0_42] : memref<8x128xf32, #tpu.memory_space<vmem>>, vector<8x128xf32>
    tpu.vector_store %arg9[%c0_41, %c0_42], %107 {strides = array<i32>} : memref<8x128xf32, #tpu.memory_space<vmem>>, vector<8x128xf32>,
    return
  }
}

</mosaic_0001>

<llo_original>
// kernel: netg_forward.3
$region0: #{netg_forward.3}
  #allocation0 [shape = 'u32[]', space=smem, size = 0x4, offset = 0x4, fixed_abs, tag = 'smem constant byte address 0x4 - core index']
  #allocation1 [shape = 'u32[144,128]{1,0:T(1,128)}', space=vmem, size = 0x12000, scoped, tag = 'internal scratch']
  %s0 = inlined_call_operand.vmem [shape: f32[8,128], index: 0, kind: input, shape index: {}]
  %s1 = inlined_call_operand.vmem [shape: f32[8,128], index: 1, kind: input, shape index: {}]
  %s2 = inlined_call_operand.vmem [shape: f32[8,16], index: 2, kind: output, shape index: {}]
  %s3 = sld [smem:[#allocation0]]
  $region18: #{netg_forward.3} parent=0
    _
  %s5 = ssub.s32 1, %s3
  %s6 = scalar_select 0, %s5, %s3
  // Predicated region
  $region2: #{netg_forward.3} parent=0 // pred_check
    _
  $region3: #{netg_forward.3} parent=0 // pred_check_branch
    %8 = sbr.rel (0) target = $region5
  $region4: #{netg_forward.3} parent=0 // pred_region
    _
  $region5: #{netg_forward.3} parent=0 // pred_fallthru
    _
  // Predicated region
  $region6: #{netg_forward.3} parent=0 // pred_check
    _
  $region7: #{netg_forward.3} parent=0 // pred_check_branch
    %10 = sbr.rel (0) target = $region9
  $region8: #{netg_forward.3} parent=0 // pred_region
    _
  $region9: #{netg_forward.3} parent=0 // pred_fallthru
    _
  %v11 = vld [vmem:[%s0] sm:$0xff]
  %v12 = vld [vmem:[%s1] sm:$0xff]
  %13 = vmatprep.subr.mxu0 0.0
  %14 = vmatpush1.xpose.msra.mxu0 %v12
  %15 = vmatprep.subr.mxu0 0.0
  %16 = vmatpush1.xpose.msra.mxu0 0.0
  %17 = vmatprep.subr.mxu0 0.0
  %18 = vmatpush1.xpose.msra.mxu0 0.0
  %19 = vmatprep.subr.mxu0 0.0
  %20 = vmatpush1.xpose.msra.mxu0 0.0
  %21 = vmatprep.subr.mxu0 0.0
  %22 = vmatpush1.xpose.msra.mxu0 0.0
  %23 = vmatprep.subr.mxu0 0.0
  %24 = vmatpush1.xpose.msra.mxu0 0.0
  %25 = vmatprep.subr.mxu0 0.0
  %26 = vmatpush1.xpose.msra.mxu0 0.0
  %27 = vmatprep.subr.mxu0 0.0
  %28 = vmatpush1.xpose.msra.mxu0 0.0
  %29 = vmatprep.subr.mxu0 0.0
  %30 = vmatpush1.xpose.msra.mxu0 0.0
  %31 = vmatprep.subr.mxu0 0.0
  %32 = vmatpush1.xpose.msra.mxu0 0.0
  %33 = vmatprep.subr.mxu0 0.0
  %34 = vmatpush1.xpose.msra.mxu0 0.0
  %35 = vmatprep.subr.mxu0 0.0
  %36 = vmatpush1.xpose.msra.mxu0 0.0
  %37 = vmatprep.subr.mxu0 0.0
  %38 = vmatpush1.xpose.msra.mxu0 0.0
  %39 = vmatprep.subr.mxu0 0.0
  %40 = vmatpush1.xpose.msra.mxu0 0.0
  %41 = vmatprep.subr.mxu0 0.0
  %42 = vmatpush1.xpose.msra.mxu0 0.0
  %43 = vmatprep.subr.mxu0 0.0
  %44 = vmatpush1.xpose.msra.mxu0 0.0
  %45 = vmatprep.subr.mxu0 0.0
  %46 = vmatpush1.xpose.msra.mxu0 0.0
  %47 = vmatprep.subr.mxu0 0.0
  %48 = vmatpush1.xpose.msra.mxu0 0.0
  %49 = vmatprep.subr.mxu0 0.0
  %50 = vmatpush1.xpose.msra.mxu0 0.0
  %51 = vmatprep.subr.mxu0 0.0
  %52 = vmatpush1.xpose.msra.mxu0 0.0
  %53 = vmatprep.subr.mxu0 0.0
  %54 = vmatpush1.xpose.msra.mxu0 0.0
  %55 = vmatprep.subr.mxu0 0.0
  %56 = vmatpush1.xpose.msra.mxu0 0.0
  %57 = vmatprep.subr.mxu0 0.0
  %58 = vmatpush1.xpose.msra.mxu0 0.0
  %59 = vmatprep.subr.mxu0 0.0
  %60 = vmatpush1.xpose.msra.mxu0 0.0
  %61 = vmatprep.subr.mxu0 0.0
  %62 = vmatpush1.xpose.msra.mxu0 0.0
  %63 = vmatprep.subr.mxu0 0.0
  %64 = vmatpush1.xpose.msra.mxu0 0.0
  %65 = vmatprep.subr.mxu0 0.0
  %66 = vmatpush1.xpose.msra.mxu0 0.0
  %67 = vmatprep.subr.mxu0 0.0
  %68 = vmatpush1.xpose.msra.mxu0 0.0
  %69 = vmatprep.subr.mxu0 0.0
  %70 = vmatpush1.xpose.msra.mxu0 0.0
  %71 = vmatprep.subr.mxu0 0.0
  %72 = vmatpush1.xpose.msra.mxu0 0.0
  %73 = vmatprep.subr.mxu0 0.0
  %74 = vmatpush1.xpose.msra.mxu0 0.0
  %75 = vmatprep.subr.mxu0 0.0
  %76 = vmatpush1.xpose.msra.mxu0 0.0
  %77 = vmatprep.mubr.f32.mxu0 0.0
  %78 = vmatmul.mubr.f32.gmra.mrb[0].mxu0 %v11
  %v79 = vpop.f32.mrb[0].mxu0
  %v80 = vadd.f32 0.0, %v79
  %v81 = vpop.f32.mrb[0].mxu0
  %82 = vdwg.mxu0
  %v83 = vand.u32 2147483647, %v80
  %vm84 = vcmp.le.f32.partialorder %v83, 0.7853982
  %vm85 = vcmp.lt.s32.totalorder %v80, 0
  %v86 = vand.u32 %v80, 2139095040
  %v87 = vshrl.u32 %v86, 23
  %v88 = vsub.s32 %v87, 127
  %v89 = vand.u32 2147483647, %v80
  %v90 = vand.u32 %v89, 8388607
  %v91 = vor.u32 %v90, 8388608
  %v92 = vsub.s32 0, %v91
  %v93 = vadd.s32 %v88, 1
  %vm94 = vcmp.gt.s32.totalorder %v93, 0
  %v95 = vsel %vm94, %v93, 0
  %v96 = vshrl.u32 %v95, 5
  %v97 = vand.u32 %v95, 31
  %v98 = vsub.s32 32, %v97
  %v99 = vshrl.u32 683565275, %v98
  %v100 = vshll.u32 683565275, %v97
  %v101 = vshrl.u32 2475754826, %v98
  %v102 = vor.u32 %v100, %v101
  %v103 = vshll.u32 2475754826, %v97
  %v104 = vshrl.u32 2131351028, %v98
  %v105 = vor.u32 %v103, %v104
  %v106 = vshll.u32 2131351028, %v97
  %v107 = vshrl.u32 2102212464, %v98
  %v108 = vor.u32 %v106, %v107
  %v109 = vshll.u32 2102212464, %v97
  %v110 = vshrl.u32 920167782, %v98
  %v111 = vor.u32 %v109, %v110
  %v112 = vshll.u32 920167782, %v97
  %v113 = vshrl.u32 1326507024, %v98
  %v114 = vor.u32 %v112, %v113
  %vm115 = vcmp.lt.s32.totalorder %v96, 1
  %vm116 = vcmp.lt.s32.totalorder %v96, 2
  %vm117 = vcmp.lt.s32.totalorder %v96, 3
  %vm118 = vcmp.lt.s32.totalorder %v96, 4
  %v119 = vsel %vm115, %v99, %v102
  %v120 = vsel %vm118, %v108, 2102212464
  %v121 = vsel %vm117, %v105, %v120
  %v122 = vsel %vm116, %v119, %v121
  %v123 = vsel %vm115, %v102, %v105
  %v124 = vsel %vm118, %v111, 920167782
  %v125 = vsel %vm117, %v108, %v124
  %v126 = vsel %vm116, %v123, %v125
  %v127 = vsel %vm115, %v105, %v108
  %v128 = vsel %vm118, %v114, 1326507024
  %v129 = vsel %vm117, %v111, %v128
  %v130 = vsel %vm116, %v127, %v129
  %v131 = vshll.u32 %v91, 8
  %v132 = vmul.u32.u64.compose %v131, %v130
  %v133 = vextract.low.u32 %v132
  %v134 = vextract.high.u32 %v132
  %v135 = vmul.u32.u64.compose %v131, %v126
  %v136 = vextract.low.u32 %v135
  %v137 = vextract.high.u32 %v135
  %v138 = vmul.u32 %v131, %v122
  %v139 = vadd.s32 %v134, %v136
  %vm140 = vc.u32 %v134, %v136
  %v141 = vadd.s32 %v137, 1
  %v142 = vsel %vm140, %v141, %v137
  %v143 = vadd.s32 %v138, %v142
  %v144 = vadd.s32 %v143, 536870912
  %v145 = vshrl.u32 %v144, 30
  %v146 = vshll.u32 %v145, 30
  %v147 = vsub.s32 %v143, %v146
  %vm148 = vcmp.lt.s32.totalorder %v147, 0
  %v149 = vsub.s32 0, %v147
  %v150 = vsel %vm148, %v149, %v147
  %v151 = vclz %v150
  %v152 = vsub.s32 %v151, 2
  %vm153 = vcmp.gt.s32.totalorder 0, %v152
  %v154 = vsel %vm153, 0, %v152
  %v155 = vsub.s32 32, %v154
  %v156 = vshll.u32 %v147, %v154
  %v157 = vshrl.u32 %v139, %v155
  %v158 = vor.u32 %v156, %v157
  %v159 = vsub.s32 4294967266, %v154
  %v160 = vadd.s32 %v159, 127
  %v161 = vshll.u32 %v160, 23
  %v162 = vor.u32 4788187, %v161
  %v163 = vand.u32 2147483647, %v162
  %v165 = vcvt.s32.f32 %v158
  %v166 = vmul.f32 %v165, %v163
  %v167 = vxor.u32 %v166, 2147483648
  %v168 = vsel %vm85, %v167, %v166
  %v169 = vsub.s32 4, %v145
  %v170 = vsel %vm85, %v169, %v145
  %v171 = vsel %vm84, %v80, %v168
  %v172 = vsel %vm84, 0, %v170
  %v173 = vcosq.f32.pop %v171
  %v174 = vsinq.f32.pop %v171
  %vm175 = vweird.f32 %v80
  %v176 = vand.u32 %v172, 3
  %vm177 = vcmp.lt.s32.totalorder %v176, 2
  %vm178 = vcmp.eq.s32.totalorder %v176, 0
  %v179 = vxor.u32 %v174, 2147483648
  %v180 = vsel %vm178, %v173, %v179
  %vm181 = vcmp.eq.s32.totalorder %v176, 2
  %v182 = vxor.u32 %v173, 2147483648
  %v183 = vsel %vm181, %v182, %v174
  %v184 = vsel %vm177, %v180, %v183
  %v185 = vsel %vm175, nan, %v184
  %v186 = vmul.f32 %v185, 0.35355338
  %vm187 = vcmask 64512
  %188 = vst.msk [vmem:[%s2] sm:$0xff] %vm187, %v186
  %v189 = vand.u32 2147483647, %v80
  %vm190 = vcmp.le.f32.partialorder %v189, 0.7853982
  %vm191 = vcmp.lt.s32.totalorder %v80, 0
  %v192 = vand.u32 %v80, 2139095040
  %v193 = vshrl.u32 %v192, 23
  %v194 = vsub.s32 %v193, 127
  %v195 = vand.u32 2147483647, %v80
  %v196 = vand.u32 %v195, 8388607
  %v197 = vor.u32 %v196, 8388608
  %v198 = vsub.s32 0, %v197
  %v199 = vadd.s32 %v194, 1
  %vm200 = vcmp.gt.s32.totalorder %v199, 0
  %v201 = vsel %vm200, %v199, 0
  %v202 = vshrl.u32 %v201, 5
  %v203 = vand.u32 %v201, 31
  %v204 = vsub.s32 32, %v203
  %v205 = vshrl.u32 683565275, %v204
  %v206 = vshll.u32 683565275, %v203
  %v207 = vshrl.u32 2475754826, %v204
  %v208 = vor.u32 %v206, %v207
  %v209 = vshll.u32 2475754826, %v203
  %v210 = vshrl.u32 2131351028, %v204
  %v211 = vor.u32 %v209, %v210
  %v212 = vshll.u32 2131351028, %v203
  %v213 = vshrl.u32 2102212464, %v204
  %v214 = vor.u32 %v212, %v213
  %v215 = vshll.u32 2102212464, %v203
  %v216 = vshrl.u32 920167782, %v204
  %v217 = vor.u32 %v215, %v216
  %v218 = vshll.u32 920167782, %v203
  %v219 = vshrl.u32 1326507024, %v204
  %v220 = vor.u32 %v218, %v219
  %vm221 = vcmp.lt.s32.totalorder %v202, 1
  %vm222 = vcmp.lt.s32.totalorder %v202, 2
  %vm223 = vcmp.lt.s32.totalorder %v202, 3
  %vm224 = vcmp.lt.s32.totalorder %v202, 4
  %v225 = vsel %vm221, %v205, %v208
  %v226 = vsel %vm224, %v214, 2102212464
  %v227 = vsel %vm223, %v211, %v226
  %v228 = vsel %vm222, %v225, %v227
  %v229 = vsel %vm221, %v208, %v211
  %v230 = vsel %vm224, %v217, 920167782
  %v231 = vsel %vm223, %v214, %v230
  %v232 = vsel %vm222, %v229, %v231
  %v233 = vsel %vm221, %v211, %v214
  %v234 = vsel %vm224, %v220, 1326507024
  %v235 = vsel %vm223, %v217, %v234
  %v236 = vsel %vm222, %v233, %v235
  %v237 = vshll.u32 %v197, 8
  %v238 = vmul.u32.u64.compose %v237, %v236
  %v239 = vextract.low.u32 %v238
  %v240 = vextract.high.u32 %v238
  %v241 = vmul.u32.u64.compose %v237, %v232
  %v242 = vextract.low.u32 %v241
  %v243 = vextract.high.u32 %v241
  %v244 = vmul.u32 %v237, %v228
  %v245 = vadd.s32 %v240, %v242
  %vm246 = vc.u32 %v240, %v242
  %v247 = vadd.s32 %v243, 1
  %v248 = vsel %vm246, %v247, %v243
  %v249 = vadd.s32 %v244, %v248
  %v250 = vadd.s32 %v249, 536870912
  %v251 = vshrl.u32 %v250, 30
  %v252 = vshll.u32 %v251, 30
  %v253 = vsub.s32 %v249, %v252
  %vm254 = vcmp.lt.s32.totalorder %v253, 0
  %v255 = vsub.s32 0, %v253
  %v256 = vsel %vm254, %v255, %v253
  %v257 = vclz %v256
  %v258 = vsub.s32 %v257, 2
  %vm259 = vcmp.gt.s32.totalorder 0, %v258
  %v260 = vsel %vm259, 0, %v258
  %v261 = vsub.s32 32, %v260
  %v262 = vshll.u32 %v253, %v260
  %v263 = vshrl.u32 %v245, %v261
  %v264 = vor.u32 %v262, %v263
  %v265 = vsub.s32 4294967266, %v260
  %v266 = vadd.s32 %v265, 127
  %v267 = vshll.u32 %v266, 23
  %v268 = vor.u32 4788187, %v267
  %v269 = vand.u32 2147483647, %v268
  %v271 = vcvt.s32.f32 %v264
  %v272 = vmul.f32 %v271, %v269
  %v273 = vxor.u32 %v272, 2147483648
  %v274 = vsel %vm191, %v273, %v272
  %v275 = vsub.s32 4, %v251
  %v276 = vsel %vm191, %v275, %v251
  %v277 = vsel %vm190, %v80, %v274
  %v278 = vsel %vm190, 0, %v276
  %v279 = vcosq.f32.pop %v277
  %v280 = vsinq.f32.pop %v277
  %vm281 = vweird.f32 %v80
  %v282 = vadd.s32 %v278, 3
  %v283 = vand.u32 %v282, 3
  %vm284 = vcmp.lt.s32.totalorder %v283, 2
  %vm285 = vcmp.eq.s32.totalorder %v283, 0
  %v286 = vxor.u32 %v280, 2147483648
  %v287 = vsel %vm285, %v279, %v286
  %vm288 = vcmp.eq.s32.totalorder %v283, 2
  %v289 = vxor.u32 %v279, 2147483648
  %v290 = vsel %vm288, %v289, %v280
  %v291 = vsel %vm284, %v287, %v290
  %v292 = vsel %vm281, nan, %v291
  %v293 = vmul.f32 %v292, 0.35355338
  %295 = vrot.lane.b32.xlu0 %v293, 8
  %v296 = vpop.permute.xlu0 %295
  %vm298 = vcmask 130112
  %299 = vst.msk [vmem:[%s2] sm:$0xff] %vm298, %v296
  // Predicated region
  $region10: #{netg_forward.3} parent=0 // pred_check
    _
  $region11: #{netg_forward.3} parent=0 // pred_check_branch
    %301 = sbr.rel (0) target = $region13
  $region12: #{netg_forward.3} parent=0 // pred_region
    _
  $region13: #{netg_forward.3} parent=0 // pred_fallthru
    _
  // Predicated region
  $region14: #{netg_forward.3} parent=0 // pred_check
    _
  $region15: #{netg_forward.3} parent=0 // pred_check_branch
    %303 = sbr.rel (0) target = $region17
  $region16: #{netg_forward.3} parent=0 // pred_region
    _
  $region17: #{netg_forward.3} parent=0 // pred_fallthru
    _

// kernel: netg_forward.2
$region0: #{netg_forward.2}
  #allocation0 [shape = 'u32[]', space=smem, size = 0x4, offset = 0x4, fixed_abs, tag = 'smem constant byte address 0x4 - core index']
  #allocation1 [shape = 'u32[144,128]{1,0:T(1,128)}', space=vmem, size = 0x12000, scoped, tag = 'internal scratch']
  %s0 = inlined_call_operand.vmem [shape: f32[8,128], index: 0, kind: input, shape index: {}]
  %s1 = inlined_call_operand.hbm [shape: f32[128,128], index: 1, kind: input, shape index: {}]
  %s2 = inlined_call_operand.vmem [shape: f32[1,128], index: 2, kind: input, shape index: {}]
  %s3 = inlined_call_operand.hbm [shape: f32[128,128], index: 3, kind: input, shape index: {}]
  %s4 = inlined_call_operand.vmem [shape: f32[1,128], index: 4, kind: input, shape index: {}]
  %s5 = inlined_call_operand.hbm [shape: f32[128,128], index: 5, kind: input, shape index: {}]
  %s6 = inlined_call_operand.vmem [shape: f32[1,128], index: 6, kind: input, shape index: {}]
  %s7 = inlined_call_operand.hbm [shape: f32[128,128], index: 7, kind: input, shape index: {}]
  %s8 = inlined_call_operand.vmem [shape: f32[1,128], index: 8, kind: input, shape index: {}]
  %s9 = inlined_call_operand.vmem [shape: f32[8,128], index: 9, kind: output, shape index: {}]
  %s10 = sld [smem:[#allocation0]]
  $region62: #{netg_forward.2} parent=0
    _
  %s12 = ssub.s32 1, %s10
  %s13 = scalar_select 0, %s12, %s10
  $region1: #{netg_forward.2} parent=0
    #allocation2 [shape = 'u8[65536]{0}', space=vmem, size = 0x10000, scoped, tag = 'input window, operand 1, single buffered']
    #allocation3 [shape = 's32[1]{0}', space=sflag, size = 0x4, scoped, tag = 'scoped memory for netg_forward.2']
    #allocation4 [shape = 'u8[65536]{0}', space=vmem, size = 0x10000, scoped, tag = 'input window, operand 3, single buffered']
    #allocation5 [shape = 's32[1]{0}', space=sflag, size = 0x4, scoped, tag = 'scoped memory for netg_forward.2']
    #allocation6 [shape = 'u8[65536]{0}', space=vmem, size = 0x10000, scoped, tag = 'input window, operand 5, single buffered']
    #allocation7 [shape = 'u8[65536]{0}', space=vmem, size = 0x10000, scoped, tag = 'input window, operand 7, single buffered']
    #allocation8 [shape = 's32[1]{0}', space=sflag, size = 0x4, scoped, tag = 'scoped memory for netg_forward.2']
    %14 = vsyncpa [#allocation3], 0
    %15 = vsyncpa [#allocation5], 0
    %16 = vsyncpa [#allocation8], 0
    // Predicated region
    $region2: #{netg_forward.2} parent=1 // pred_check
      _
    $region3: #{netg_forward.2} parent=1 // pred_check_branch
      %18 = sbr.rel (0) target = $region5
    $region4: #{netg_forward.2} parent=1 // pred_region
      _
    $region5: #{netg_forward.2} parent=1 // pred_fallthru
      _
    // Predicated region
    $region6: #{netg_forward.2} parent=1 // pred_check
      _
    $region7: #{netg_forward.2} parent=1 // pred_check_branch
      %20 = sbr.rel (0) target = $region9
    $region8: #{netg_forward.2} parent=1 // pred_region
      %s22 = ssub.s32 2048, 2048
      %23 = vsyncadd [#allocation3], %s22
      %s24 = sshll.u32 [#allocation2], 4
      %s25 = int_to_ptr.vmem [resolvable:$true] %s24
      %30 = dma.hbm_to_vmem [thread:$0]  %s1, 2048, %s25, [#allocation3], 128, 128, 8
    $region9: #{netg_forward.2} parent=1 // pred_fallthru
      _
    // Predicated region
    $region10: #{netg_forward.2} parent=1 // pred_check
      _
    $region11: #{netg_forward.2} parent=1 // pred_check_branch
      %32 = sbr.rel (0) target = $region13
    $region12: #{netg_forward.2} parent=1 // pred_region
      _
    $region13: #{netg_forward.2} parent=1 // pred_fallthru
      _
    // Predicated region
    $region14: #{netg_forward.2} parent=1 // pred_check
      _
    $region15: #{netg_forward.2} parent=1 // pred_check_branch
      %34 = sbr.rel (0) target = $region17
    $region16: #{netg_forward.2} parent=1 // pred_region
      %s36 = ssub.s32 2048, 2048
      %37 = vsyncadd [#allocation5], %s36
      %s38 = sshll.u32 [#allocation4], 4
      %s39 = int_to_ptr.vmem [resolvable:$true] %s38
      %44 = dma.hbm_to_vmem [thread:$0]  %s3, 2048, %s39, [#allocation5], 128, 128, 8
    $region17: #{netg_forward.2} parent=1 // pred_fallthru
      _
    // Predicated region
    $region18: #{netg_forward.2} parent=1 // pred_check
      _
    $region19: #{netg_forward.2} parent=1 // pred_check_branch
      %46 = sbr.rel (0) target = $region21
    $region20: #{netg_forward.2} parent=1 // pred_region
      _
    $region21: #{netg_forward.2} parent=1 // pred_fallthru
      _
    // Predicated region
    $region22: #{netg_forward.2} parent=1 // pred_check
      _
    $region23: #{netg_forward.2} parent=1 // pred_check_branch
      %48 = sbr.rel (0) target = $region25
    $region24: #{netg_forward.2} parent=1 // pred_region
      %s50 = ssub.s32 2048, 2048
      %51 = vsyncadd [#allocation5], %s50
      %s52 = sshll.u32 [#allocation6], 4
      %s53 = int_to_ptr.vmem [resolvable:$true] %s52
      %58 = dma.hbm_to_vmem [thread:$0]  %s5, 2048, %s53, [#allocation5], 128, 128, 8
    $region25: #{netg_forward.2} parent=1 // pred_fallthru
      _
    // Predicated region
    $region26: #{netg_forward.2} parent=1 // pred_check
      _
    $region27: #{netg_forward.2} parent=1 // pred_check_branch
      %60 = sbr.rel (0) target = $region29
    $region28: #{netg_forward.2} parent=1 // pred_region
      _
    $region29: #{netg_forward.2} parent=1 // pred_fallthru
      _
    // Predicated region
    $region30: #{netg_forward.2} parent=1 // pred_check
      _
    $region31: #{netg_forward.2} parent=1 // pred_check_branch
      %62 = sbr.rel (0) target = $region33
    $region32: #{netg_forward.2} parent=1 // pred_region
      %s64 = ssub.s32 2048, 2048
      %65 = vsyncadd [#allocation8], %s64
      %s66 = sshll.u32 [#allocation7], 4
      %s67 = int_to_ptr.vmem [resolvable:$true] %s66
      %72 = dma.hbm_to_vmem [thread:$0]  %s7, 2048, %s67, [#allocation8], 128, 128, 8
    $region33: #{netg_forward.2} parent=1 // pred_fallthru
      _
    // Predicated region
    $region34: #{netg_forward.2} parent=1 // pred_check
      _
    $region35: #{netg_forward.2} parent=1 // pred_check_branch
      %74 = sbr.rel (0) target = $region37
    $region36: #{netg_forward.2} parent=1 // pred_region
      _
    $region37: #{netg_forward.2} parent=1 // pred_fallthru
      _
    // Predicated region
    $region38: #{netg_forward.2} parent=1 // pred_check
      _
    $region39: #{netg_forward.2} parent=1 // pred_check_branch
      %76 = sbr.rel (0) target = $region41
    $region40: #{netg_forward.2} parent=1 // pred_region
      %77 = dma.done [#allocation3], 2048
    $region41: #{netg_forward.2} parent=1 // pred_fallthru
      _
    // Predicated region
    $region42: #{netg_forward.2} parent=1 // pred_check
      _
    $region43: #{netg_forward.2} parent=1 // pred_check_branch
      %79 = sbr.rel (0) target = $region45
    $region44: #{netg_forward.2} parent=1 // pred_region
      %80 = dma.done [#allocation5], 2048
    $region45: #{netg_forward.2} parent=1 // pred_fallthru
      _
    // Predicated region
    $region46: #{netg_forward.2} parent=1 // pred_check
      _
    $region47: #{netg_forward.2} parent=1 // pred_check_branch
      %82 = sbr.rel (0) target = $region49
    $region48: #{netg_forward.2} parent=1 // pred_region
      %83 = dma.done [#allocation5], 2048
    $region49: #{netg_forward.2} parent=1 // pred_fallthru
      _
    // Predicated region
    $region50: #{netg_forward.2} parent=1 // pred_check
      _
    $region51: #{netg_forward.2} parent=1 // pred_check_branch
      %85 = sbr.rel (0) target = $region53
    $region52: #{netg_forward.2} parent=1 // pred_region
      %86 = dma.done [#allocation8], 2048
    $region53: #{netg_forward.2} parent=1 // pred_fallthru
      _
    %v87 = vlaneseq
    %v88 = vshrl.u32 %v87, 7
    %vm89 = vcmp.lt.s32.totalorder %v88, 8
    %v90 = vsel %vm89, 1, 0
    %v91 = vcvt.s32.f32 %v90
    %v92 = vld [vmem:[%s0] sm:$0xff]
    %v93 = vld [vmem:[#allocation2] sm:$0xff]
    %v94 = vld [vmem:[#allocation2 + $0x8] sm:$0xff]
    %v95 = vld [vmem:[#allocation2 + $0x10] sm:$0xff]
    %v96 = vld [vmem:[#allocation2 + $0x18] sm:$0xff]
    %v97 = vld [vmem:[#allocation2 + $0x20] sm:$0xff]
    %v98 = vld [vmem:[#allocation2 + $0x28] sm:$0xff]
    %v99 = vld [vmem:[#allocation2 + $0x30] sm:$0xff]
    %v100 = vld [vmem:[#allocation2 + $0x38] sm:$0xff]
    %v101 = vld [vmem:[#allocation2 + $0x40] sm:$0xff]
    %v102 = vld [vmem:[#allocation2 + $0x48] sm:$0xff]
    %v103 = vld [vmem:[#allocation2 + $0x50] sm:$0xff]
    %v104 = vld [vmem:[#allocation2 + $0x58] sm:$0xff]
    %v105 = vld [vmem:[#allocation2 + $0x60] sm:$0xff]
    %v106 = vld [vmem:[#allocation2 + $0x68] sm:$0xff]
    %v107 = vld [vmem:[#allocation2 + $0x70] sm:$0xff]
    %v108 = vld [vmem:[#allocation2 + $0x78] sm:$0xff]
    %v109 = vld [vmem:[%s2] sm:$0x1]
    %v111 = vlaneseq
    %v112 = vshrl.u32 %v111, 7
    %v113 = vsub.s32 0, %v112
    %v114 = vrot.slane %v109, %v113
    %116 = vmatprep.subr.mxu0 0.0
    %117 = vmatpush1.msra.mxu0 %v93
    %118 = vmatprep.subr.mxu0 0.0
    %119 = vmatpush1.msra.mxu0 %v94
    %120 = vmatprep.subr.mxu0 0.0
    %121 = vmatpush1.msra.mxu0 %v95
    %122 = vmatprep.subr.mxu0 0.0
    %123 = vmatpush1.msra.mxu0 %v96
    %124 = vmatprep.subr.mxu0 0.0
    %125 = vmatpush1.msra.mxu0 %v97
    %126 = vmatprep.subr.mxu0 0.0
    %127 = vmatpush1.msra.mxu0 %v98
    %128 = vmatprep.subr.mxu0 0.0
    %129 = vmatpush1.msra.mxu0 %v99
    %130 = vmatprep.subr.mxu0 0.0
    %131 = vmatpush1.msra.mxu0 %v100
    %132 = vmatprep.subr.mxu0 0.0
    %133 = vmatpush1.msra.mxu0 %v101
    %134 = vmatprep.subr.mxu0 0.0
    %135 = vmatpush1.msra.mxu0 %v102
    %136 = vmatprep.subr.mxu0 0.0
    %137 = vmatpush1.msra.mxu0 %v103
    %138 = vmatprep.subr.mxu0 0.0
    %139 = vmatpush1.msra.mxu0 %v104
    %140 = vmatprep.subr.mxu0 0.0
    %141 = vmatpush1.msra.mxu0 %v105
    %142 = vmatprep.subr.mxu0 0.0
    %143 = vmatpush1.msra.mxu0 %v106
    %144 = vmatprep.subr.mxu0 0.0
    %145 = vmatpush1.msra.mxu0 %v107
    %146 = vmatprep.subr.mxu0 0.0
    %147 = vmatpush1.msra.mxu0 %v108
    %148 = vmatprep.subr.mxu0 0.0
    %149 = vmatpush1.msra.mxu0 0.0
    %150 = vmatprep.subr.mxu0 0.0
    %151 = vmatpush1.msra.mxu0 0.0
    %152 = vmatprep.subr.mxu0 0.0
    %153 = vmatpush1.msra.mxu0 0.0
    %154 = vmatprep.subr.mxu0 0.0
    %155 = vmatpush1.msra.mxu0 0.0
    %156 = vmatprep.subr.mxu0 0.0
    %157 = vmatpush1.msra.mxu0 0.0
    %158 = vmatprep.subr.mxu0 0.0
    %159 = vmatpush1.msra.mxu0 0.0
    %160 = vmatprep.subr.mxu0 0.0
    %161 = vmatpush1.msra.mxu0 0.0
    %162 = vmatprep.subr.mxu0 0.0
    %163 = vmatpush1.msra.mxu0 0.0
    %164 = vmatprep.subr.mxu0 0.0
    %165 = vmatpush1.msra.mxu0 0.0
    %166 = vmatprep.subr.mxu0 0.0
    %167 = vmatpush1.msra.mxu0 0.0
    %168 = vmatprep.subr.mxu0 0.0
    %169 = vmatpush1.msra.mxu0 0.0
    %170 = vmatprep.subr.mxu0 0.0
    %171 = vmatpush1.msra.mxu0 0.0
    %172 = vmatprep.subr.mxu0 0.0
    %173 = vmatpush1.msra.mxu0 0.0
    %174 = vmatprep.subr.mxu0 0.0
    %175 = vmatpush1.msra.mxu0 0.0
    %176 = vmatprep.subr.mxu0 0.0
    %177 = vmatpush1.msra.mxu0 0.0
    %178 = vmatprep.subr.mxu0 0.0
    %179 = vmatpush1.msra.mxu0 0.0
    %180 = vmatprep.mubr.f32.mxu0 0.0
    %181 = vmatmul.mubr.f32.gmra.mrb[0].mxu0 %v92
    %v182 = vpop.f32.mrb[0].mxu0
    %v183 = vadd.f32 %v114, %v182
    %v184 = vpop.f32.mrb[0].mxu0
    %185 = vdwg.mxu0
    %v186 = vmul.f32 %v183, %v91
    %v187 = vrot.slane %v186, 4
    %v188 = vadd.f32 %v186, %v187
    %v189 = vrot.slane %v188, 2
    %v190 = vadd.f32 %v188, %v189
    %v191 = vrot.slane %v190, 1
    %v192 = vadd.f32 %v190, %v191
    %v193 = vmul.f32 %v192, 0.125
    %v194 = vsub.f32 %v183, %v193
    %v195 = vmul.f32 %v194, %v91
    %v196 = vmul.f32 %v195, %v195
    %v197 = vrot.slane %v196, 4
    %v198 = vadd.f32 %v196, %v197
    %v199 = vrot.slane %v198, 2
    %v200 = vadd.f32 %v198, %v199
    %v201 = vrot.slane %v200, 1
    %v202 = vadd.f32 %v200, %v201
    %v203 = vmul.f32 %v202, 0.125
    %v204 = vadd.f32 %v203, 1e-05
    %v205 = vrsqrt.pop %v204
    %v206 = vmul.f32 %v194, %v205
    %vm207 = vcmp.ge.f32.partialorder %v206, 0.0
    %v208 = vmul.f32 %v206, 0.01
    %v209 = vsel %vm207, %v206, %v208
    %v210 = vld [vmem:[#allocation4] sm:$0xff]
    %v211 = vld [vmem:[#allocation4 + $0x8] sm:$0xff]
    %v212 = vld [vmem:[#allocation4 + $0x10] sm:$0xff]
    %v213 = vld [vmem:[#allocation4 + $0x18] sm:$0xff]
    %v214 = vld [vmem:[#allocation4 + $0x20] sm:$0xff]
    %v215 = vld [vmem:[#allocation4 + $0x28] sm:$0xff]
    %v216 = vld [vmem:[#allocation4 + $0x30] sm:$0xff]
    %v217 = vld [vmem:[#allocation4 + $0x38] sm:$0xff]
    %v218 = vld [vmem:[#allocation4 + $0x40] sm:$0xff]
    %v219 = vld [vmem:[#allocation4 + $0x48] sm:$0xff]
    %v220 = vld [vmem:[#allocation4 + $0x50] sm:$0xff]
    %v221 = vld [vmem:[#allocation4 + $0x58] sm:$0xff]
    %v222 = vld [vmem:[#allocation4 + $0x60] sm:$0xff]
    %v223 = vld [vmem:[#allocation4 + $0x68] sm:$0xff]
    %v224 = vld [vmem:[#allocation4 + $0x70] sm:$0xff]
    %v225 = vld [vmem:[#allocation4 + $0x78] sm:$0xff]
    %v226 = vld [vmem:[%s4] sm:$0x1]
    %v228 = vlaneseq
    %v229 = vshrl.u32 %v228, 7
    %v230 = vsub.s32 0, %v229
    %v231 = vrot.slane %v226, %v230
    %233 = vmatprep.subr.mxu0 0.0
    %234 = vmatpush1.msra.mxu0 %v210
    %235 = vmatprep.subr.mxu0 0.0
    %236 = vmatpush1.msra.mxu0 %v211
    %237 = vmatprep.subr.mxu0 0.0
    %238 = vmatpush1.msra.mxu0 %v212
    %239 = vmatprep.subr.mxu0 0.0
    %240 = vmatpush1.msra.mxu0 %v213
    %241 = vmatprep.subr.mxu0 0.0
    %242 = vmatpush1.msra.mxu0 %v214
    %243 = vmatprep.subr.mxu0 0.0
    %244 = vmatpush1.msra.mxu0 %v215
    %245 = vmatprep.subr.mxu0 0.0
    %246 = vmatpush1.msra.mxu0 %v216
    %247 = vmatprep.subr.mxu0 0.0
    %248 = vmatpush1.msra.mxu0 %v217
    %249 = vmatprep.subr.mxu0 0.0
    %250 = vmatpush1.msra.mxu0 %v218
    %251 = vmatprep.subr.mxu0 0.0
    %252 = vmatpush1.msra.mxu0 %v219
    %253 = vmatprep.subr.mxu0 0.0
    %254 = vmatpush1.msra.mxu0 %v220
    %255 = vmatprep.subr.mxu0 0.0
    %256 = vmatpush1.msra.mxu0 %v221
    %257 = vmatprep.subr.mxu0 0.0
    %258 = vmatpush1.msra.mxu0 %v222
    %259 = vmatprep.subr.mxu0 0.0
    %260 = vmatpush1.msra.mxu0 %v223
    %261 = vmatprep.subr.mxu0 0.0
    %262 = vmatpush1.msra.mxu0 %v224
    %263 = vmatprep.subr.mxu0 0.0
    %264 = vmatpush1.msra.mxu0 %v225
    %265 = vmatprep.subr.mxu0 0.0
    %266 = vmatpush1.msra.mxu0 0.0
    %267 = vmatprep.subr.mxu0 0.0
    %268 = vmatpush1.msra.mxu0 0.0
    %269 = vmatprep.subr.mxu0 0.0
    %270 = vmatpush1.msra.mxu0 0.0
    %271 = vmatprep.subr.mxu0 0.0
    %272 = vmatpush1.msra.mxu0 0.0
    %273 = vmatprep.subr.mxu0 0.0
    %274 = vmatpush1.msra.mxu0 0.0
    %275 = vmatprep.subr.mxu0 0.0
    %276 = vmatpush1.msra.mxu0 0.0
    %277 = vmatprep.subr.mxu0 0.0
    %278 = vmatpush1.msra.mxu0 0.0
    %279 = vmatprep.subr.mxu0 0.0
    %280 = vmatpush1.msra.mxu0 0.0
    %281 = vmatprep.subr.mxu0 0.0
    %282 = vmatpush1.msra.mxu0 0.0
    %283 = vmatprep.subr.mxu0 0.0
    %284 = vmatpush1.msra.mxu0 0.0
    %285 = vmatprep.subr.mxu0 0.0
    %286 = vmatpush1.msra.mxu0 0.0
    %287 = vmatprep.subr.mxu0 0.0
    %288 = vmatpush1.msra.mxu0 0.0
    %289 = vmatprep.subr.mxu0 0.0
    %290 = vmatpush1.msra.mxu0 0.0
    %291 = vmatprep.subr.mxu0 0.0
    %292 = vmatpush1.msra.mxu0 0.0
    %293 = vmatprep.subr.mxu0 0.0
    %294 = vmatpush1.msra.mxu0 0.0
    %295 = vmatprep.subr.mxu0 0.0
    %296 = vmatpush1.msra.mxu0 0.0
    %297 = vmatprep.mubr.f32.mxu0 0.0
    %298 = vmatmul.mubr.f32.gmra.mrb[0].mxu0 %v209
    %v299 = vpop.f32.mrb[0].mxu0
    %v300 = vadd.f32 %v231, %v299
    %v301 = vpop.f32.mrb[0].mxu0
    %302 = vdwg.mxu0
    %v303 = vmul.f32 %v300, %v91
    %v304 = vrot.slane %v303, 4
    %v305 = vadd.f32 %v303, %v304
    %v306 = vrot.slane %v305, 2
    %v307 = vadd.f32 %v305, %v306
    %v308 = vrot.slane %v307, 1
    %v309 = vadd.f32 %v307, %v308
    %v310 = vmul.f32 %v309, 0.125
    %v311 = vsub.f32 %v300, %v310
    %v312 = vmul.f32 %v311, %v91
    %v313 = vmul.f32 %v312, %v312
    %v314 = vrot.slane %v313, 4
    %v315 = vadd.f32 %v313, %v314
    %v316 = vrot.slane %v315, 2
    %v317 = vadd.f32 %v315, %v316
    %v318 = vrot.slane %v317, 1
    %v319 = vadd.f32 %v317, %v318
    %v320 = vmul.f32 %v319, 0.125
    %v321 = vadd.f32 %v320, 1e-05
    %v322 = vrsqrt.pop %v321
    %v323 = vmul.f32 %v311, %v322
    %vm324 = vcmp.ge.f32.partialorder %v323, 0.0
    %v325 = vmul.f32 %v323, 0.01
    %v326 = vsel %vm324, %v323, %v325
    %v327 = vld [vmem:[#allocation6] sm:$0xff]
    %v328 = vld [vmem:[#allocation6 + $0x8] sm:$0xff]
    %v329 = vld [vmem:[#allocation6 + $0x10] sm:$0xff]
    %v330 = vld [vmem:[#allocation6 + $0x18] sm:$0xff]
    %v331 = vld [vmem:[#allocation6 + $0x20] sm:$0xff]
    %v332 = vld [vmem:[#allocation6 + $0x28] sm:$0xff]
    %v333 = vld [vmem:[#allocation6 + $0x30] sm:$0xff]
    %v334 = vld [vmem:[#allocation6 + $0x38] sm:$0xff]
    %v335 = vld [vmem:[#allocation6 + $0x40] sm:$0xff]
    %v336 = vld [vmem:[#allocation6 + $0x48] sm:$0xff]
    %v337 = vld [vmem:[#allocation6 + $0x50] sm:$0xff]
    %v338 = vld [vmem:[#allocation6 + $0x58] sm:$0xff]
    %v339 = vld [vmem:[#allocation6 + $0x60] sm:$0xff]
    %v340 = vld [vmem:[#allocation6 + $0x68] sm:$0xff]
    %v341 = vld [vmem:[#allocation6 + $0x70] sm:$0xff]
    %v342 = vld [vmem:[#allocation6 + $0x78] sm:$0xff]
    %v343 = vld [vmem:[%s6] sm:$0x1]
    %v345 = vlaneseq
    %v346 = vshrl.u32 %v345, 7
    %v347 = vsub.s32 0, %v346
    %v348 = vrot.slane %v343, %v347
    %350 = vmatprep.subr.mxu0 0.0
    %351 = vmatpush1.msra.mxu0 %v327
    %352 = vmatprep.subr.mxu0 0.0
    %353 = vmatpush1.msra.mxu0 %v328
    %354 = vmatprep.subr.mxu0 0.0
    %355 = vmatpush1.msra.mxu0 %v329
    %356 = vmatprep.subr.mxu0 0.0
    %357 = vmatpush1.msra.mxu0 %v330
    %358 = vmatprep.subr.mxu0 0.0
    %359 = vmatpush1.msra.mxu0 %v331
    %360 = vmatprep.subr.mxu0 0.0
    %361 = vmatpush1.msra.mxu0 %v332
    %362 = vmatprep.subr.mxu0 0.0
    %363 = vmatpush1.msra.mxu0 %v333
    %364 = vmatprep.subr.mxu0 0.0
    %365 = vmatpush1.msra.mxu0 %v334
    %366 = vmatprep.subr.mxu0 0.0
    %367 = vmatpush1.msra.mxu0 %v335
    %368 = vmatprep.subr.mxu0 0.0
    %369 = vmatpush1.msra.mxu0 %v336
    %370 = vmatprep.subr.mxu0 0.0
    %371 = vmatpush1.msra.mxu0 %v337
    %372 = vmatprep.subr.mxu0 0.0
    %373 = vmatpush1.msra.mxu0 %v338
    %374 = vmatprep.subr.mxu0 0.0
    %375 = vmatpush1.msra.mxu0 %v339
    %376 = vmatprep.subr.mxu0 0.0
    %377 = vmatpush1.msra.mxu0 %v340
    %378 = vmatprep.subr.mxu0 0.0
    %379 = vmatpush1.msra.mxu0 %v341
    %380 = vmatprep.subr.mxu0 0.0
    %381 = vmatpush1.msra.mxu0 %v342
    %382 = vmatprep.subr.mxu0 0.0
    %383 = vmatpush1.msra.mxu0 0.0
    %384 = vmatprep.subr.mxu0 0.0
    %385 = vmatpush1.msra.mxu0 0.0
    %386 = vmatprep.subr.mxu0 0.0
    %387 = vmatpush1.msra.mxu0 0.0
    %388 = vmatprep.subr.mxu0 0.0
    %389 = vmatpush1.msra.mxu0 0.0
    %390 = vmatprep.subr.mxu0 0.0
    %391 = vmatpush1.msra.mxu0 0.0
    %392 = vmatprep.subr.mxu0 0.0
    %393 = vmatpush1.msra.mxu0 0.0
    %394 = vmatprep.subr.mxu0 0.0
    %395 = vmatpush1.msra.mxu0 0.0
    %396 = vmatprep.subr.mxu0 0.0
    %397 = vmatpush1.msra.mxu0 0.0
    %398 = vmatprep.subr.mxu0 0.0
    %399 = vmatpush1.msra.mxu0 0.0
    %400 = vmatprep.subr.mxu0 0.0
    %401 = vmatpush1.msra.mxu0 0.0
    %402 = vmatprep.subr.mxu0 0.0
    %403 = vmatpush1.msra.mxu0 0.0
    %404 = vmatprep.subr.mxu0 0.0
    %405 = vmatpush1.msra.mxu0 0.0
    %406 = vmatprep.subr.mxu0 0.0
    %407 = vmatpush1.msra.mxu0 0.0
    %408 = vmatprep.subr.mxu0 0.0
    %409 = vmatpush1.msra.mxu0 0.0
    %410 = vmatprep.subr.mxu0 0.0
    %411 = vmatpush1.msra.mxu0 0.0
    %412 = vmatprep.subr.mxu0 0.0
    %413 = vmatpush1.msra.mxu0 0.0
    %414 = vmatprep.mubr.f32.mxu0 0.0
    %415 = vmatmul.mubr.f32.gmra.mrb[0].mxu0 %v326
    %v416 = vpop.f32.mrb[0].mxu0
    %v417 = vadd.f32 %v348, %v416
    %v418 = vpop.f32.mrb[0].mxu0
    %419 = vdwg.mxu0
    %v420 = vmul.f32 %v417, %v91
    %v421 = vrot.slane %v420, 4
    %v422 = vadd.f32 %v420, %v421
    %v423 = vrot.slane %v422, 2
    %v424 = vadd.f32 %v422, %v423
    %v425 = vrot.slane %v424, 1
    %v426 = vadd.f32 %v424, %v425
    %v427 = vmul.f32 %v426, 0.125
    %v428 = vsub.f32 %v417, %v427
    %v429 = vmul.f32 %v428, %v91
    %v430 = vmul.f32 %v429, %v429
    %v431 = vrot.slane %v430, 4
    %v432 = vadd.f32 %v430, %v431
    %v433 = vrot.slane %v432, 2
    %v434 = vadd.f32 %v432, %v433
    %v435 = vrot.slane %v434, 1
    %v436 = vadd.f32 %v434, %v435
    %v437 = vmul.f32 %v436, 0.125
    %v438 = vadd.f32 %v437, 1e-05
    %v439 = vrsqrt.pop %v438
    %v440 = vmul.f32 %v428, %v439
    %vm441 = vcmp.ge.f32.partialorder %v440, 0.0
    %v442 = vmul.f32 %v440, 0.01
    %v443 = vsel %vm441, %v440, %v442
    %v444 = vld [vmem:[#allocation7] sm:$0xff]
    %v445 = vld [vmem:[#allocation7 + $0x8] sm:$0xff]
    %v446 = vld [vmem:[#allocation7 + $0x10] sm:$0xff]
    %v447 = vld [vmem:[#allocation7 + $0x18] sm:$0xff]
    %v448 = vld [vmem:[#allocation7 + $0x20] sm:$0xff]
    %v449 = vld [vmem:[#allocation7 + $0x28] sm:$0xff]
    %v450 = vld [vmem:[#allocation7 + $0x30] sm:$0xff]
    %v451 = vld [vmem:[#allocation7 + $0x38] sm:$0xff]
    %v452 = vld [vmem:[#allocation7 + $0x40] sm:$0xff]
    %v453 = vld [vmem:[#allocation7 + $0x48] sm:$0xff]
    %v454 = vld [vmem:[#allocation7 + $0x50] sm:$0xff]
    %v455 = vld [vmem:[#allocation7 + $0x58] sm:$0xff]
    %v456 = vld [vmem:[#allocation7 + $0x60] sm:$0xff]
    %v457 = vld [vmem:[#allocation7 + $0x68] sm:$0xff]
    %v458 = vld [vmem:[#allocation7 + $0x70] sm:$0xff]
    %v459 = vld [vmem:[#allocation7 + $0x78] sm:$0xff]
    %v460 = vld [vmem:[%s8] sm:$0x1]
    %v462 = vlaneseq
    %v463 = vshrl.u32 %v462, 7
    %v464 = vsub.s32 0, %v463
    %v465 = vrot.slane %v460, %v464
    %467 = vmatprep.subr.mxu0 0.0
    %468 = vmatpush1.msra.mxu0 %v444
    %469 = vmatprep.subr.mxu0 0.0
    %470 = vmatpush1.msra.mxu0 %v445
    %471 = vmatprep.subr.mxu0 0.0
    %472 = vmatpush1.msra.mxu0 %v446
    %473 = vmatprep.subr.mxu0 0.0
    %474 = vmatpush1.msra.mxu0 %v447
    %475 = vmatprep.subr.mxu0 0.0
    %476 = vmatpush1.msra.mxu0 %v448
    %477 = vmatprep.subr.mxu0 0.0
    %478 = vmatpush1.msra.mxu0 %v449
    %479 = vmatprep.subr.mxu0 0.0
    %480 = vmatpush1.msra.mxu0 %v450
    %481 = vmatprep.subr.mxu0 0.0
    %482 = vmatpush1.msra.mxu0 %v451
    %483 = vmatprep.subr.mxu0 0.0
    %484 = vmatpush1.msra.mxu0 %v452
    %485 = vmatprep.subr.mxu0 0.0
    %486 = vmatpush1.msra.mxu0 %v453
    %487 = vmatprep.subr.mxu0 0.0
    %488 = vmatpush1.msra.mxu0 %v454
    %489 = vmatprep.subr.mxu0 0.0
    %490 = vmatpush1.msra.mxu0 %v455
    %491 = vmatprep.subr.mxu0 0.0
    %492 = vmatpush1.msra.mxu0 %v456
    %493 = vmatprep.subr.mxu0 0.0
    %494 = vmatpush1.msra.mxu0 %v457
    %495 = vmatprep.subr.mxu0 0.0
    %496 = vmatpush1.msra.mxu0 %v458
    %497 = vmatprep.subr.mxu0 0.0
    %498 = vmatpush1.msra.mxu0 %v459
    %499 = vmatprep.subr.mxu0 0.0
    %500 = vmatpush1.msra.mxu0 0.0
    %501 = vmatprep.subr.mxu0 0.0
    %502 = vmatpush1.msra.mxu0 0.0
    %503 = vmatprep.subr.mxu0 0.0
    %504 = vmatpush1.msra.mxu0 0.0
    %505 = vmatprep.subr.mxu0 0.0
    %506 = vmatpush1.msra.mxu0 0.0
    %507 = vmatprep.subr.mxu0 0.0
    %508 = vmatpush1.msra.mxu0 0.0
    %509 = vmatprep.subr.mxu0 0.0
    %510 = vmatpush1.msra.mxu0 0.0
    %511 = vmatprep.subr.mxu0 0.0
    %512 = vmatpush1.msra.mxu0 0.0
    %513 = vmatprep.subr.mxu0 0.0
    %514 = vmatpush1.msra.mxu0 0.0
    %515 = vmatprep.subr.mxu0 0.0
    %516 = vmatpush1.msra.mxu0 0.0
    %517 = vmatprep.subr.mxu0 0.0
    %518 = vmatpush1.msra.mxu0 0.0
    %519 = vmatprep.subr.mxu0 0.0
    %520 = vmatpush1.msra.mxu0 0.0
    %521 = vmatprep.subr.mxu0 0.0
    %522 = vmatpush1.msra.mxu0 0.0
    %523 = vmatprep.subr.mxu0 0.0
    %524 = vmatpush1.msra.mxu0 0.0
    %525 = vmatprep.subr.mxu0 0.0
    %526 = vmatpush1.msra.mxu0 0.0
    %527 = vmatprep.subr.mxu0 0.0
    %528 = vmatpush1.msra.mxu0 0.0
    %529 = vmatprep.subr.mxu0 0.0
    %530 = vmatpush1.msra.mxu0 0.0
    %531 = vmatprep.mubr.f32.mxu0 0.0
    %532 = vmatmul.mubr.f32.gmra.mrb[0].mxu0 %v443
    %v533 = vpop.f32.mrb[0].mxu0
    %v534 = vadd.f32 %v465, %v533
    %v535 = vpop.f32.mrb[0].mxu0
    %536 = vdwg.mxu0
    %v537 = vtanh.pop %v534
    %538 = vst [vmem:[%s9] sm:$0xff] %v537
    // Predicated region
    $region54: #{netg_forward.2} parent=1 // pred_check
      _
    $region55: #{netg_forward.2} parent=1 // pred_check_branch
      %540 = sbr.rel (0) target = $region57
    $region56: #{netg_forward.2} parent=1 // pred_region
      _
    $region57: #{netg_forward.2} parent=1 // pred_fallthru
      _
    // Predicated region
    $region58: #{netg_forward.2} parent=1 // pred_check
      _
    $region59: #{netg_forward.2} parent=1 // pred_check_branch
      %542 = sbr.rel (0) target = $region61
    $region60: #{netg_forward.2} parent=1 // pred_region
      _
    $region61: #{netg_forward.2} parent=1 // pred_fallthru
      _
    %543 = vsyncpa [#allocation3], 1
    %544 = vsyncpa [#allocation5], 1
    %545 = vsyncpa [#allocation8], 1

</llo_original>
